<compile_context>
chip_gen: v6e
topology: v6e:2x2x1
jax: 0.10.0
libtpu: 0.0.40
codegen_flags: <defaults>
</compile_context>

<pallas_src>
import jax
import jax.numpy as jnp
from jax.experimental import pallas as pl
from jax.experimental.pallas import tpu as pltpu

_SUBLANE = 8


def _mlp_vpu_kernel(x_ref, w1_ref, b1_ref, w2_ref, b2_ref, o_ref):
    # Shapes (static): x (tb, K), w1 (K, H), b1 (1, H), w2 (H, O), b2 (1, O).
    K = x_ref.shape[1]
    H = w1_ref.shape[1]

    x = x_ref[...].astype(jnp.float32)
    w1 = w1_ref[...].astype(jnp.float32)
    b1 = b1_ref[...].astype(jnp.float32)
    w2 = w2_ref[...].astype(jnp.float32)
    b2 = b2_ref[...].astype(jnp.float32)

    # Layer 1: K broadcast-FMAs on the VPU (K tiny & static), then tanh (EUP).
    h = x[:, 0:1] * w1[0:1, :] + b1                     # (tb, H)
    for k in range(1, K):
        h = h + x[:, k:k + 1] * w1[k:k + 1, :]
    h = jnp.tanh(h)

    # Layer 2: H broadcast-FMAs on the VPU.
    o = h[:, 0:1] * w2[0:1, :] + b2                     # (tb, O)
    for j in range(1, H):
        o = o + h[:, j:j + 1] * w2[j:j + 1, :]

    o_ref[...] = o.astype(o_ref.dtype)


def simple_classifier_forward(x, w1, b1, w2, b2, *, max_batch_tile=2048):
    """Fused Linear -> Tanh -> Linear forward (PyTorch SimpleClassifier)."""
    B, K = x.shape
    Kw, H = w1.shape
    Hw, O = w2.shape
    assert Kw == K and Hw == H and b1.shape == (H,) and b2.shape == (O,)
    dtype = x.dtype

    # Biases as 2-D (1, N) tiles for TPU layout.
    b1_2d = b1.reshape(1, H)
    b2_2d = b2.reshape(1, O)

    # Batch tile: full batch if it fits (block dim == full array dim is always
    # legal), otherwise a sublane-aligned cap; last ragged block is handled by
    # Pallas (out-of-range rows are masked on store, rows are independent).
    if B <= max_batch_tile:
        tb = B
    else:
        tb = max(_SUBLANE, (max_batch_tile // _SUBLANE) * _SUBLANE)
    grid = (pl.cdiv(B, tb),)

    return pl.pallas_call(
        _mlp_vpu_kernel,
        out_shape=jax.ShapeDtypeStruct((B, O), dtype),
        grid=grid,
        in_specs=[
            pl.BlockSpec((tb, K), lambda i: (i, 0)),   # x: pipelined over batch
            pl.BlockSpec((K, H), lambda i: (0, 0)),    # W1: VMEM-resident
            pl.BlockSpec((1, H), lambda i: (0, 0)),    # b1: VMEM-resident
            pl.BlockSpec((H, O), lambda i: (0, 0)),    # W2: VMEM-resident
            pl.BlockSpec((1, O), lambda i: (0, 0)),    # b2: VMEM-resident
        ],
        out_specs=pl.BlockSpec((tb, O), lambda i: (i, 0)),
        compiler_params=pltpu.CompilerParams(
            dimension_semantics=("parallel",),
        ),
    )(x, w1, b1_2d, w2, b2_2d)


if __name__ == "__main__":
    key = jax.random.PRNGKey(0)
    k_x, k_w1, k_b1, k_w2, k_b2 = jax.random.split(key, 5)

    # Shapes implied by the continuousXOR SimpleClassifier:
    # input_dim=2, hidden_dim=4, output_dim=1, small batch.
    batch, input_dim, hidden_dim, output_dim = 8, 2, 4, 1

    x = jax.random.normal(k_x, (batch, input_dim), dtype=jnp.float32)
    w1 = jax.random.normal(k_w1, (input_dim, hidden_dim), dtype=jnp.float32) * 0.5
    b1 = jax.random.normal(k_b1, (hidden_dim,), dtype=jnp.float32) * 0.1
    w2 = jax.random.normal(k_w2, (hidden_dim, output_dim), dtype=jnp.float32) * 0.5
    b2 = jax.random.normal(k_b2, (output_dim,), dtype=jnp.float32) * 0.1

    out = simple_classifier_forward(x, w1, b1, w2, b2)
    out = jax.block_until_ready(out)

    # Pure-JAX reference: Linear -> Tanh -> Linear.
    ref = jnp.tanh(x @ w1 + b1) @ w2 + b2

    assert out.shape == (batch, output_dim) and out.dtype == x.dtype
    assert bool(jnp.allclose(out, ref, atol=1e-5, rtol=1e-5))

    print("KERNEL_OK")
</pallas_src>

<mosaic_0001>
module attributes {stable_mosaic.version = 11 : i64} {
  func.func @_mlp_vpu_kernel(%arg0: i32, %arg1: memref<8x2xf32, #tpu.memory_space<vmem>>, %arg2: memref<2x4xf32, #tpu.memory_space<vmem>>, %arg3: memref<1x4xf32, #tpu.memory_space<vmem>>, %arg4: memref<4x1xf32, #tpu.memory_space<vmem>>, %arg5: memref<1x1xf32, #tpu.memory_space<vmem>>, %arg6: memref<8x1xf32, #tpu.memory_space<vmem>>) attributes {dimension_semantics = [#tpu.dimension_semantics<parallel>], iteration_bounds = array<i64: 1>, scalar_prefetch = 0 : i64, scratch_operands = 0 : i64, tpu.core_type = #tpu.core_type<tc>, window_params = [{transform_indices = @transform_0, window_bounds = array<i64: 8, 2>}, {pipeline_mode = #tpu.pipeline_mode<synchronous>, transform_indices = @transform_1, window_bounds = array<i64: 2, 4>}, {pipeline_mode = #tpu.pipeline_mode<synchronous>, transform_indices = @transform_2, window_bounds = array<i64: 1, 4>}, {pipeline_mode = #tpu.pipeline_mode<synchronous>, transform_indices = @transform_3, window_bounds = array<i64: 4, 1>}, {pipeline_mode = #tpu.pipeline_mode<synchronous>, transform_indices = @transform_4, window_bounds = array<i64: 1, 1>}, {transform_indices = @transform_5, window_bounds = array<i64: 8, 1>}]} {
    %c0 = arith.constant 0 : index
    %c0_0 = arith.constant 0 : index
    %0 = vector.load %arg1[%c0, %c0_0] : memref<8x2xf32, #tpu.memory_space<vmem>>, vector<8x2xf32>
    %c0_1 = arith.constant 0 : index
    %c0_2 = arith.constant 0 : index
    %1 = vector.load %arg2[%c0_1, %c0_2] : memref<2x4xf32, #tpu.memory_space<vmem>>, vector<2x4xf32>
    %c0_3 = arith.constant 0 : index
    %c0_4 = arith.constant 0 : index
    %2 = vector.load %arg3[%c0_3, %c0_4] : memref<1x4xf32, #tpu.memory_space<vmem>>, vector<1x4xf32>
    %c0_5 = arith.constant 0 : index
    %c0_6 = arith.constant 0 : index
    %3 = vector.load %arg4[%c0_5, %c0_6] : memref<4x1xf32, #tpu.memory_space<vmem>>, vector<4x1xf32>
    %c0_7 = arith.constant 0 : index
    %c0_8 = arith.constant 0 : index
    %4 = vector.load %arg5[%c0_7, %c0_8] : memref<1x1xf32, #tpu.memory_space<vmem>>, vector<1x1xf32>
    %5 = vector.extract_strided_slice %0 {offsets = [0, 0], sizes = [8, 1], strides = [1, 1]} : vector<8x2xf32> to vector<8x1xf32>
    %6 = vector.extract_strided_slice %1 {offsets = [0, 0], sizes = [1, 4], strides = [1, 1]} : vector<2x4xf32> to vector<1x4xf32>
    %7 = vector.broadcast %5 : vector<8x1xf32> to vector<8x4xf32>
    %8 = vector.broadcast %6 : vector<1x4xf32> to vector<8x4xf32>
    %9 = arith.mulf %7, %8 : vector<8x4xf32>
    %10 = vector.broadcast %2 : vector<1x4xf32> to vector<8x4xf32>
    %11 = arith.addf %9, %10 : vector<8x4xf32>
    %12 = vector.extract_strided_slice %0 {offsets = [0, 1], sizes = [8, 1], strides = [1, 1]} : vector<8x2xf32> to vector<8x1xf32>
    %13 = vector.extract_strided_slice %1 {offsets = [1, 0], sizes = [1, 4], strides = [1, 1]} : vector<2x4xf32> to vector<1x4xf32>
    %14 = vector.broadcast %12 : vector<8x1xf32> to vector<8x4xf32>
    %15 = vector.broadcast %13 : vector<1x4xf32> to vector<8x4xf32>
    %16 = arith.mulf %14, %15 : vector<8x4xf32>
    %17 = arith.addf %11, %16 : vector<8x4xf32>
    %18 = math.tanh %17 : vector<8x4xf32>
    %19 = vector.extract_strided_slice %18 {offsets = [0, 0], sizes = [8, 1], strides = [1, 1]} : vector<8x4xf32> to vector<8x1xf32>
    %20 = vector.extract_strided_slice %3 {offsets = [0, 0], sizes = [1, 1], strides = [1, 1]} : vector<4x1xf32> to vector<1x1xf32>
    %21 = vector.broadcast %20 : vector<1x1xf32> to vector<8x1xf32>
    %22 = arith.mulf %19, %21 : vector<8x1xf32>
    %23 = vector.broadcast %4 : vector<1x1xf32> to vector<8x1xf32>
    %24 = arith.addf %22, %23 : vector<8x1xf32>
    %25 = vector.extract_strided_slice %18 {offsets = [0, 1], sizes = [8, 1], strides = [1, 1]} : vector<8x4xf32> to vector<8x1xf32>
    %26 = vector.extract_strided_slice %3 {offsets = [1, 0], sizes = [1, 1], strides = [1, 1]} : vector<4x1xf32> to vector<1x1xf32>
    %27 = vector.broadcast %26 : vector<1x1xf32> to vector<8x1xf32>
    %28 = arith.mulf %25, %27 : vector<8x1xf32>
    %29 = arith.addf %24, %28 : vector<8x1xf32>
    %30 = vector.extract_strided_slice %18 {offsets = [0, 2], sizes = [8, 1], strides = [1, 1]} : vector<8x4xf32> to vector<8x1xf32>
    %31 = vector.extract_strided_slice %3 {offsets = [2, 0], sizes = [1, 1], strides = [1, 1]} : vector<4x1xf32> to vector<1x1xf32>
    %32 = vector.broadcast %31 : vector<1x1xf32> to vector<8x1xf32>
    %33 = arith.mulf %30, %32 : vector<8x1xf32>
    %34 = arith.addf %29, %33 : vector<8x1xf32>
    %35 = vector.extract_strided_slice %18 {offsets = [0, 3], sizes = [8, 1], strides = [1, 1]} : vector<8x4xf32> to vector<8x1xf32>
    %36 = vector.extract_strided_slice %3 {offsets = [3, 0], sizes = [1, 1], strides = [1, 1]} : vector<4x1xf32> to vector<1x1xf32>
    %37 = vector.broadcast %36 : vector<1x1xf32> to vector<8x1xf32>
    %38 = arith.mulf %35, %37 : vector<8x1xf32>
    %39 = arith.addf %34, %38 : vector<8x1xf32>
    %c0_9 = arith.constant 0 : index
    %c0_10 = arith.constant 0 : index
    %40 = vector.load %arg6[%c0_9, %c0_10] : memref<8x1xf32, #tpu.memory_space<vmem>>, vector<8x1xf32>
    tpu.vector_store %arg6[%c0_9, %c0_10], %39 {strides = array<i32>} : memref<8x1xf32, #tpu.memory_space<vmem>>, vector<8x1xf32>,
    return
  }
  func.func @transform_0(%arg0: i32) -> (i32, i32) {
    %c0_i32 = arith.constant 0 : i32
    %c0_i32_0 = arith.constant 0 : i32
    return %arg0, %c0_i32 : i32, i32
  }
  func.func @transform_1(%arg0: i32) -> (i32, i32) {
    %c0_i32 = arith.constant 0 : i32
    %c0_i32_0 = arith.constant 0 : i32
    %c0_i32_1 = arith.constant 0 : i32
    return %c0_i32, %c0_i32_0 : i32, i32
  }
  func.func @transform_2(%arg0: i32) -> (i32, i32) {
    %c0_i32 = arith.constant 0 : i32
    %c0_i32_0 = arith.constant 0 : i32
    %c0_i32_1 = arith.constant 0 : i32
    return %c0_i32, %c0_i32_0 : i32, i32
  }
  func.func @transform_3(%arg0: i32) -> (i32, i32) {
    %c0_i32 = arith.constant 0 : i32
    %c0_i32_0 = arith.constant 0 : i32
    %c0_i32_1 = arith.constant 0 : i32
    return %c0_i32, %c0_i32_0 : i32, i32
  }
  func.func @transform_4(%arg0: i32) -> (i32, i32) {
    %c0_i32 = arith.constant 0 : i32
    %c0_i32_0 = arith.constant 0 : i32
    %c0_i32_1 = arith.constant 0 : i32
    return %c0_i32, %c0_i32_0 : i32, i32
  }
  func.func @transform_5(%arg0: i32) -> (i32, i32) {
    %c0_i32 = arith.constant 0 : i32
    %c0_i32_0 = arith.constant 0 : i32
    return %arg0, %c0_i32 : i32, i32
  }
}

</mosaic_0001>

<llo_original>
// kernel: tpu_custom_call.1
$region0: #{tpu_custom_call.1}
  #allocation0 [shape = 'u32[]', space=smem, size = 0x4, offset = 0x4, fixed_abs, tag = 'smem constant byte address 0x4 - core index']
  #allocation1 [shape = 'u32[144,128]{1,0:T(1,128)}', space=vmem, size = 0x12000, scoped, tag = 'internal scratch']
  #allocation2 [shape = 'f32[1,1]{1,0:T(1,128)S(1)}', space=vmem, size = 0x200, scoped, tag = 'scoped memory for tpu_custom_call.1']
  %s0 = inlined_call_operand.vmem [shape: f32[8,2], index: 0, kind: input, shape index: {}]
  %s1 = inlined_call_operand.vmem [shape: f32[2,4], index: 1, kind: input, shape index: {}]
  %s2 = inlined_call_operand.vmem [shape: f32[1,4], index: 2, kind: input, shape index: {}]
  %s3 = inlined_call_operand.vmem [shape: f32[4,1], index: 3, kind: input, shape index: {}]
  %s4 = inlined_call_operand.<no memory space> [shape: f32[1,1], index: 4, kind: input, shape index: {}]
  %s5 = inlined_call_operand.vmem [shape: f32[8,1], index: 5, kind: output, shape index: {}]
  %s6 = sld [smem:[#allocation0]]
  $region30: #{tpu_custom_call.1} parent=0
    _
  %s8 = ssub.s32 1, %s6
  %s9 = scalar_select 0, %s8, %s6
  %v10 = vstv %s4
  %11 = vst [vmem:[#allocation2] sm:$0x1] %v10
  // Predicated region
  $region2: #{tpu_custom_call.1} parent=0 // pred_check
    _
  $region3: #{tpu_custom_call.1} parent=0 // pred_check_branch
    %13 = sbr.rel (0) target = $region5
  $region4: #{tpu_custom_call.1} parent=0 // pred_region
    _
  $region5: #{tpu_custom_call.1} parent=0 // pred_fallthru
    _
  // Predicated region
  $region6: #{tpu_custom_call.1} parent=0 // pred_check
    _
  $region7: #{tpu_custom_call.1} parent=0 // pred_check_branch
    %15 = sbr.rel (0) target = $region9
  $region8: #{tpu_custom_call.1} parent=0 // pred_region
    _
  $region9: #{tpu_custom_call.1} parent=0 // pred_fallthru
    _
  // Predicated region
  $region10: #{tpu_custom_call.1} parent=0 // pred_check
    _
  $region11: #{tpu_custom_call.1} parent=0 // pred_check_branch
    %17 = sbr.rel (0) target = $region13
  $region12: #{tpu_custom_call.1} parent=0 // pred_region
    _
  $region13: #{tpu_custom_call.1} parent=0 // pred_fallthru
    _
  // Predicated region
  $region14: #{tpu_custom_call.1} parent=0 // pred_check
    _
  $region15: #{tpu_custom_call.1} parent=0 // pred_check_branch
    %19 = sbr.rel (0) target = $region17
  $region16: #{tpu_custom_call.1} parent=0 // pred_region
    _
  $region17: #{tpu_custom_call.1} parent=0 // pred_fallthru
    _
  // Predicated region
  $region18: #{tpu_custom_call.1} parent=0 // pred_check
    _
  $region19: #{tpu_custom_call.1} parent=0 // pred_check_branch
    %21 = sbr.rel (0) target = $region21
  $region20: #{tpu_custom_call.1} parent=0 // pred_region
    _
  $region21: #{tpu_custom_call.1} parent=0 // pred_fallthru
    _
  %v22 = vld [vmem:[%s0] sm:$0xff]
  %v23 = vld [vmem:[%s1] sm:$0x3]
  %v24 = vld [vmem:[%s2] sm:$0x1]
  %v25 = vld [vmem:[%s3] sm:$0xf]
  %v26 = vld [vmem:[#allocation2] sm:$0x1]
  %28 = vset.pattern.permute.xlu0 0
  %29 = vperm.xlu0 %28, %v22
  %v30 = vpop.permute.xlu0 %29
  %v32 = vlaneseq
  %v33 = vshrl.u32 %v32, 7
  %v34 = vsub.s32 0, %v33
  %v35 = vrot.slane %v23, %v34
  %v36 = vmul.f32 %v30, %v35
  %v38 = vlaneseq
  %v39 = vshrl.u32 %v38, 7
  %v40 = vsub.s32 0, %v39
  %v41 = vrot.slane %v24, %v40
  %v43 = vadd.f32 %v36, %v41
  %44 = vset.pattern.permute.xlu0 1
  %45 = vperm.xlu0 %44, %v22
  %v46 = vpop.permute.xlu0 %45
  %v48 = vlaneseq
  %v49 = vshrl.u32 %v48, 7
  %v50 = vsub.s32 1, %v49
  %v51 = vrot.slane %v23, %v50
  %v52 = vmul.f32 %v46, %v51
  %v53 = vadd.f32 %v43, %v52
  %v54 = vtanh.pop %v53
  %v55 = vlaneseq
  %v56 = vshrl.u32 %v55, 7
  %v57 = vsub.s32 0, %v56
  %v58 = vrot.slane %v25, %v57
  %v59 = vmul.f32 %v54, %v58
  %v61 = vlaneseq
  %v62 = vshrl.u32 %v61, 7
  %v63 = vsub.s32 0, %v62
  %v64 = vrot.slane %v26, %v63
  %v66 = vadd.f32 %v59, %v64
  %v67 = vlaneseq
  %v68 = vshrl.u32 %v67, 7
  %v69 = vsub.s32 1, %v68
  %v70 = vrot.slane %v25, %v69
  %72 = vrot.lane.b32.xlu0 %v70, 1
  %v73 = vpop.permute.xlu0 %72
  %v75 = vmul.f32 %v54, %v73
  %77 = vrot.lane.b32.xlu0 %v75, 127
  %v78 = vpop.permute.xlu0 %77
  %v80 = vadd.f32 %v66, %v78
  %v81 = vlaneseq
  %v82 = vshrl.u32 %v81, 7
  %v83 = vsub.s32 2, %v82
  %v84 = vrot.slane %v25, %v83
  %86 = vrot.lane.b32.xlu0 %v84, 2
  %v87 = vpop.permute.xlu0 %86
  %v89 = vmul.f32 %v54, %v87
  %91 = vrot.lane.b32.xlu0 %v89, 126
  %v92 = vpop.permute.xlu0 %91
  %v94 = vadd.f32 %v80, %v92
  %v95 = vlaneseq
  %v96 = vshrl.u32 %v95, 7
  %v97 = vsub.s32 3, %v96
  %v98 = vrot.slane %v25, %v97
  %100 = vrot.lane.b32.xlu0 %v98, 3
  %v101 = vpop.permute.xlu0 %100
  %v103 = vmul.f32 %v54, %v101
  %105 = vrot.lane.b32.xlu0 %v103, 125
  %v106 = vpop.permute.xlu0 %105
  %v108 = vadd.f32 %v94, %v106
  %vm109 = vcmask 7168
  %110 = vst.msk [vmem:[%s5] sm:$0xff] %vm109, %v108
  // Predicated region
  $region22: #{tpu_custom_call.1} parent=0 // pred_check
    _
  $region23: #{tpu_custom_call.1} parent=0 // pred_check_branch
    %112 = sbr.rel (0) target = $region25
  $region24: #{tpu_custom_call.1} parent=0 // pred_region
    _
  $region25: #{tpu_custom_call.1} parent=0 // pred_fallthru
    _
  // Predicated region
  $region26: #{tpu_custom_call.1} parent=0 // pred_check
    _
  $region27: #{tpu_custom_call.1} parent=0 // pred_check_branch
    %114 = sbr.rel (0) target = $region29
  $region28: #{tpu_custom_call.1} parent=0 // pred_region
    _
  $region29: #{tpu_custom_call.1} parent=0 // pred_fallthru
    _

</llo_original>
